<compile_context>
chip_gen: v7x
topology: tpu7x:2x2x1
jax: 0.10.0
libtpu: 0.0.40
codegen_flags: <defaults>
</compile_context>

<pallas_src>
import jax
import jax.numpy as jnp
from jax.experimental import pallas as pl
from jax.experimental.pallas import tpu as pltpu

_SMALL_BYTES = 512 * 1024           # below this a fused XLA multiply beats kernel-launch cost
_MARGIN_BYTES = 4 * 1024 * 1024     # VMEM headroom for Mosaic-internal scratch


def _mul_kernel(x_ref, y_ref, o_ref):
    # Hot path: one VPU elementwise multiply over the current VMEM tile.
    o_ref[...] = x_ref[...] * y_ref[...]


def _cdiv(a, b):
    return -(-a // b)


def _round_up(a, b):
    return _cdiv(a, b) * b


def _tpu_topology():
    """Best-effort (vmem_capacity_bytes, has_two_tensorcores); conservative fallbacks."""
    kind = ""
    try:
        kind = (getattr(jax.devices()[0], "device_kind", "") or "").lower()
    except Exception:
        pass
    # v5e / v6e have a single TensorCore per chip -> skip the forced grid split there.
    single_tc = any(
        tag in kind for tag in ("v5e", "v5 lite", "v5lite", "v6e", "v6 lite", "v6lite")
    )
    vmem = None
    try:
        info = pltpu.get_tpu_info()
        cap = getattr(info, "vmem_capacity_bytes", None)
        if cap:
            vmem = int(cap)
    except Exception:
        vmem = None
    if vmem is None:
        # 128 MiB on v5e/v6e; otherwise assume the conservative 64 MiB (v7x per-TC).
        vmem = 128 * 1024 * 1024 if single_tc else 64 * 1024 * 1024
    return vmem, (not single_tc)


def _choose_tile_rows(rows, bytes_per_row, sub_align, target_bytes, two_tc):
    """Rows per block. Result is a multiple of sub_align, or == rows (full-extent block)."""
    target_rows = max(sub_align, (target_bytes // bytes_per_row) // sub_align * sub_align)

    if not two_tc or rows < 2 * sub_align:
        # Single-TC chip (or too small to split): full-extent block when it fits, else
        # bandwidth-optimal tiles (Pallas masks the ragged tail).
        return rows if rows <= target_rows else target_rows

    # 2-TC chip: aim for an EVEN number of balanced grid steps with tiles near the target
    # size, so dimension_semantics=("parallel",) gives both TensorCores equal work.
    ideal = _cdiv(rows, target_rows)
    candidates = sorted({
        2,
        max(2, 2 * (ideal // 2)),
        2 * _cdiv(ideal, 2),
        2 * _cdiv(ideal, 2) + 2,
    })
    # Never let a tile exceed ~1.5x the target (keeps the VMEM reservation bounded).
    max_tile_rows = max(
        sub_align, ((3 * target_bytes // 2) // bytes_per_row) // sub_align * sub_align
    )
    best, best_key = None, None
    for steps in candidates:
        tr = _round_up(_cdiv(rows, steps), sub_align)
        if tr >= rows or tr > max_tile_rows:
            continue
        n_steps = _cdiv(rows, tr)
        last = rows - (n_steps - 1) * tr
        key = (
            n_steps % 2,                      # prefer an even step count (both TCs busy)
            0 if 4 * last >= 3 * tr else 1,   # prefer ragged tail >= 75% of a tile
            abs(tr - target_rows),            # stay near the bandwidth-optimal tile size
        )
        if best_key is None or key < best_key:
            best, best_key = tr, key
    if best is None:
        return rows if rows <= target_rows else target_rows
    return best


def elementwise_mul(x: jax.Array, y: jax.Array, *,
                    force_kernel: bool = False, donate_x: bool = False) -> jax.Array:
    """Elementwise multiply via a Pallas TPU kernel. x and y must have equal shape/dtype."""
    assert x.shape == y.shape, "broadcasting not needed for this module's usage"
    assert x.dtype == y.dtype
    orig_shape = x.shape
    n = x.size
    itemsize = jnp.dtype(x.dtype).itemsize

    # Any multiple-of-128 width performs identically (each row block is one contiguous HBM
    # chunk; stores stay lane-dense); 128 keeps row granularity fine for 2-TC balancing.
    width = 128 if n % 128 == 0 else None
    tiny = n * itemsize < _SMALL_BYTES
    if width is None or (tiny and not force_kernel):
        # Unaligned element count or tiny input: no jnp.pad, no kernel-launch overhead;
        # let XLA fuse the multiply. (force_kernel=True still lands here if n % 128 != 0.)
        return x * y

    rows = n // width
    bytes_per_row = width * itemsize
    # Sublane alignment for the dtype (f32: 8, bf16: 16, int8: 32) -> unmasked stores.
    sub_align = max(8, 32 // itemsize)

    vmem_capacity, two_tc = _tpu_topology()
    # ~8 MiB per-operand tiles on 128 MiB-VMEM parts (v5e/v6e), ~4 MiB on 64 MiB (v7x).
    target_tile_bytes = (8 if vmem_capacity >= 100 * 1024 * 1024 else 4) * 1024 * 1024

    tile_rows = _choose_tile_rows(rows, bytes_per_row, sub_align, target_tile_bytes, two_tc)
    grid_steps = _cdiv(rows, tile_rows)
    tile_bytes = tile_rows * bytes_per_row

    # 3-deep input buffering hides DMA-issue jitter on long streaming grids.
    in_buffers = 2
    in_pipeline_mode = None
    buffered_cls = getattr(pl, "Buffered", None)
    if grid_steps >= 3 and buffered_cls is not None:
        in_pipeline_mode = buffered_cls(3)
        in_buffers = 3

    def _in_spec():
        if in_pipeline_mode is not None:
            try:
                return pl.BlockSpec((tile_rows, width), lambda i: (i, 0),
                                    pipeline_mode=in_pipeline_mode)
            except TypeError:
                pass  # older BlockSpec without pipeline_mode: default double-buffering
        return pl.BlockSpec((tile_rows, width), lambda i: (i, 0))

    # Size the VMEM reservation from the actual tiles (2 inputs x in_buffers + output x 2)
    # plus a small margin, rather than a flat cap, so v7x's 64 MiB keeps headroom.
    vmem_limit = int(tile_bytes * (2 * in_buffers + 2) + _MARGIN_BYTES)
    vmem_limit = max(vmem_limit, 16 * 1024 * 1024)

    x2 = x.reshape(rows, width)
    y2 = y.reshape(rows, width)

    out2 = pl.pallas_call(
        _mul_kernel,
        out_shape=jax.ShapeDtypeStruct((rows, width), x.dtype),
        grid_spec=pltpu.PrefetchScalarGridSpec(
            num_scalar_prefetch=0,
            grid=(grid_steps,),
            in_specs=[_in_spec(), _in_spec()],
            out_specs=pl.BlockSpec((tile_rows, width), lambda i: (i, 0)),
        ),
        compiler_params=pltpu.CompilerParams(
            dimension_semantics=("parallel",),
            vmem_limit_bytes=vmem_limit,
        ),
        # When the caller donates x, write the result over x's HBM buffer (saves one HBM
        # allocation / output copy; streamed bytes are unchanged).
        input_output_aliases=({0: 0} if donate_x else {}),
    )(x2, y2)

    return out2.reshape(orig_shape)


if __name__ == "__main__":
    key = jax.random.PRNGKey(0)
    kx, ky, ka, kb = jax.random.split(key, 4)

    # 1) Small shape matching the module's typical usage; force the Pallas kernel path so
    #    the kernel is exercised (the wrapper would otherwise fall back for tiny inputs).
    shape = (2, 4, 16, 16)
    x = jax.random.normal(kx, shape, dtype=jnp.float32)
    y = jax.random.normal(ky, shape, dtype=jnp.float32)
    out = jax.block_until_ready(elementwise_mul(x, y, force_kernel=True))
    # Mirror the module's print(output.shape).
    print(out.shape)
    ref = x * y
    assert out.shape == ref.shape and out.dtype == ref.dtype
    assert jnp.allclose(out, ref), "mismatch vs reference elementwise multiply (small)"

    # 2) Medium, aligned shape to exercise the streaming path (balanced 2-step grid on
    #    2-TC chips, single full-extent block on v5e/v6e).
    shape2 = (8, 16, 64, 128)
    a = jax.random.normal(ka, shape2, dtype=jnp.float32)
    b = jax.random.normal(kb, shape2, dtype=jnp.float32)
    out2 = jax.block_until_ready(elementwise_mul(a, b))
    ref2 = a * b
    assert out2.shape == ref2.shape and out2.dtype == ref2.dtype
    assert jnp.allclose(out2, ref2), "mismatch vs reference elementwise multiply (medium)"

    print("KERNEL_OK")
</pallas_src>

<mosaic_0001>
module attributes {stable_mosaic.version = 11 : i64} {
  func.func @_mul_kernel(%arg0: i32, %arg1: memref<8x128xf32, #tpu.memory_space<vmem>>, %arg2: memref<8x128xf32, #tpu.memory_space<vmem>>, %arg3: memref<8x128xf32, #tpu.memory_space<vmem>>) attributes {dimension_semantics = [#tpu.dimension_semantics<parallel>], iteration_bounds = array<i64: 2>, scalar_prefetch = 0 : i64, scratch_operands = 0 : i64, tpu.core_type = #tpu.core_type<tc>, window_params = [{transform_indices = @transform_0, window_bounds = array<i64: 8, 128>}, {transform_indices = @transform_1, window_bounds = array<i64: 8, 128>}, {transform_indices = @transform_2, window_bounds = array<i64: 8, 128>}]} {
    %c0 = arith.constant 0 : index
    %c0_0 = arith.constant 0 : index
    %0 = vector.load %arg1[%c0, %c0_0] : memref<8x128xf32, #tpu.memory_space<vmem>>, vector<8x128xf32>
    %c0_1 = arith.constant 0 : index
    %c0_2 = arith.constant 0 : index
    %1 = vector.load %arg2[%c0_1, %c0_2] : memref<8x128xf32, #tpu.memory_space<vmem>>, vector<8x128xf32>
    %2 = arith.mulf %0, %1 : vector<8x128xf32>
    %c0_3 = arith.constant 0 : index
    %c0_4 = arith.constant 0 : index
    %3 = vector.load %arg3[%c0_3, %c0_4] : memref<8x128xf32, #tpu.memory_space<vmem>>, vector<8x128xf32>
    tpu.vector_store %arg3[%c0_3, %c0_4], %2 {strides = array<i32>} : memref<8x128xf32, #tpu.memory_space<vmem>>, vector<8x128xf32>,
    return
  }
  func.func @transform_0(%arg0: i32) -> (i32, i32) {
    %c0_i32 = arith.constant 0 : i32
    %c0_i32_0 = arith.constant 0 : i32
    return %arg0, %c0_i32 : i32, i32
  }
  func.func @transform_1(%arg0: i32) -> (i32, i32) {
    %c0_i32 = arith.constant 0 : i32
    %c0_i32_0 = arith.constant 0 : i32
    return %arg0, %c0_i32 : i32, i32
  }
  func.func @transform_2(%arg0: i32) -> (i32, i32) {
    %c0_i32 = arith.constant 0 : i32
    %c0_i32_0 = arith.constant 0 : i32
    return %arg0, %c0_i32 : i32, i32
  }
}

</mosaic_0001>

<llo_original>
// kernel: tpu_custom_call.1
$region0: #{tpu_custom_call.1}
  #allocation0 [shape = 'u32[]', space=smem, size = 0x4, offset = 0x4, fixed_abs, tag = 'smem constant byte address 0x4 - core index']
  #allocation1 [shape = 'u32[144,128]{1,0:T(1,128)}', space=vmem, size = 0x12000, scoped, tag = 'internal scratch']
  %s0 = inlined_call_operand.hbm [shape: f32[16,128], index: 0, kind: input, shape index: {}]
  %s1 = inlined_call_operand.hbm [shape: f32[16,128], index: 1, kind: input, shape index: {}]
  %s2 = inlined_call_operand.hbm [shape: f32[16,128], index: 2, kind: output, shape index: {}]
  %s3 = sld [smem:[#allocation0]]
  $region49: #{tpu_custom_call.1} parent=0
    _
  %s5 = ssub.s32 1, %s3
  %s6 = scalar_select 0, %s5, %s3
  $region1: #{tpu_custom_call.1} parent=0
    #allocation2 [shape = 'u8[8192]{0}', space=vmem, size = 0x2000, scoped, tag = 'input window, operand 0']
    #allocation3 [shape = 's32[2]{0}', space=sflag, size = 0x8, scoped, tag = 'scoped memory for tpu_custom_call.1']
    #allocation4 [shape = 's32[2]{0}', space=sflag, size = 0x8, scoped, tag = 'scoped memory for tpu_custom_call.1']
    #allocation5 [shape = 'u8[8192]{0}', space=vmem, size = 0x2000, scoped, tag = 'input window, operand 1']
    #allocation6 [shape = 's32[2]{0}', space=sflag, size = 0x8, scoped, tag = 'scoped memory for tpu_custom_call.1']
    #allocation7 [shape = 'u8[8192]{0}', space=vmem, size = 0x2000, scoped, tag = 'output window, operand 0']
    %7 = vsyncpa [#allocation3], 0
    %s8 = scalar_lea.sflag [#allocation3], 1
    %9 = vsyncpa %s8, 0
    %10 = vsyncpa [#allocation6], 0
    %s11 = scalar_lea.sflag [#allocation6], 1
    %12 = vsyncpa %s11, 0
    %13 = vsyncpa [#allocation4], 0
    %s14 = scalar_lea.sflag [#allocation4], 1
    %15 = vsyncpa %s14, 0
    loop: start=0, step=1, limit=4
    $region2: #{tpu_custom_call.1} parent=1 // loop_pre_header
      _
    $region3: #{tpu_custom_call.1} parent=1 // loop_header
      %s17 = sphi 0, %s21
      %p18 = scmp.ge.s32.totalorder %s17, 4
      %s27 = sphi 0, %s29
      %s30 = sphi 0, %s27
      %s31 = sphi 0, %s30
      %s47 = sphi 0, %s31
      %s53 = sphi 0, %s55
      %s56 = sphi 0, %s53
      %s57 = sphi 0, %s56
      %s73 = sphi 0, %s57
      %s79 = sphi 0, %s81
      %s82 = sphi 0, %s79
      %s83 = sphi 0, %s82
      %s99 = sphi 0, %s83
    $region4: #{tpu_custom_call.1} parent=1 // loop_header_branch
      %20 = sbr.rel (%p18) target = $region8
    $region5: #{tpu_custom_call.1} parent=1 // loop_body
      %s22 = ssub.s32 %s17, 1
      %s23 = ssub.s32 %s17, 2
      %s24 = sadd.s32 %s17, 1
      %s25 = ssub.s32 %s17, %s24
      %p26 = scmp.eq.s32.totalorder %s25, 0
      %s28 = sadd.s32 %s27, 1
      %s29 = scalar_select %p26, %s27, %s28
      %p32 = pneg %p26
      %p33 = scmp.eq.s32.totalorder %s17, 1
      %p34 = por %p32, %p33
      %p35 = scmp.ne.s32.totalorder %s27, %s30
      %p36 = scmp.eq.s32.totalorder %s17, 0
      %p37 = por %p35, %p36
      %p38 = scmp.ne.s32.totalorder %s27, %s30
      %p39 = scmp.eq.s32.totalorder %s22, 1
      %p40 = por %p38, %p39
      %p41 = scmp.ne.s32.totalorder %s30, %s31
      %p42 = scmp.eq.s32.totalorder %s22, 0
      %p43 = por %p41, %p42
      %p44 = scmp.ne.s32.totalorder %s30, %s31
      %p45 = scmp.eq.s32.totalorder %s23, 1
      %p46 = por %p44, %p45
      %p48 = scmp.ne.s32.totalorder %s31, %s47
      %p49 = scmp.eq.s32.totalorder %s23, 0
      %p50 = por %p48, %p49
      %s51 = ssub.s32 %s17, %s24
      %p52 = scmp.eq.s32.totalorder %s51, 0
      %s54 = sadd.s32 %s53, 1
      %s55 = scalar_select %p52, %s53, %s54
      %p58 = pneg %p52
      %p59 = scmp.eq.s32.totalorder %s17, 1
      %p60 = por %p58, %p59
      %p61 = scmp.ne.s32.totalorder %s53, %s56
      %p62 = scmp.eq.s32.totalorder %s17, 0
      %p63 = por %p61, %p62
      %p64 = scmp.ne.s32.totalorder %s53, %s56
      %p65 = scmp.eq.s32.totalorder %s22, 1
      %p66 = por %p64, %p65
      %p67 = scmp.ne.s32.totalorder %s56, %s57
      %p68 = scmp.eq.s32.totalorder %s22, 0
      %p69 = por %p67, %p68
      %p70 = scmp.ne.s32.totalorder %s56, %s57
      %p71 = scmp.eq.s32.totalorder %s23, 1
      %p72 = por %p70, %p71
      %p74 = scmp.ne.s32.totalorder %s57, %s73
      %p75 = scmp.eq.s32.totalorder %s23, 0
      %p76 = por %p74, %p75
      %s77 = ssub.s32 %s17, %s24
      %p78 = scmp.eq.s32.totalorder %s77, 0
      %s80 = sadd.s32 %s79, 1
      %s81 = scalar_select %p78, %s79, %s80
      %p84 = pneg %p78
      %p85 = scmp.eq.s32.totalorder %s17, 1
      %p86 = por %p84, %p85
      %p87 = scmp.ne.s32.totalorder %s79, %s82
      %p88 = scmp.eq.s32.totalorder %s17, 0
      %p89 = por %p87, %p88
      %p90 = scmp.ne.s32.totalorder %s79, %s82
      %p91 = scmp.eq.s32.totalorder %s22, 1
      %p92 = por %p90, %p91
      %p93 = scmp.ne.s32.totalorder %s82, %s83
      %p94 = scmp.eq.s32.totalorder %s22, 0
      %p95 = por %p93, %p94
      %p96 = scmp.ne.s32.totalorder %s82, %s83
      %p97 = scmp.eq.s32.totalorder %s23, 1
      %p98 = por %p96, %p97
      %p100 = scmp.ne.s32.totalorder %s83, %s99
      %p101 = scmp.eq.s32.totalorder %s23, 0
      %p102 = por %p100, %p101
      %p103 = scmp.le.s32.totalorder 1, %s17
      %p104 = scmp.lt.s32.totalorder %s17, 3
      %p105 = pnand %p103, %p104
      %p106 = pneg %p105
      // Predicated region
      $region9: #{tpu_custom_call.1} parent=5 // pred_check
        _
      $region10: #{tpu_custom_call.1} parent=5 // pred_check_branch
        %108 = sbr.rel (%p105) target = $region12
      $region11: #{tpu_custom_call.1} parent=5 // pred_region
        %s109 = ssub.s32 %s17, 1
      $region12: #{tpu_custom_call.1} parent=5 // pred_fallthru
        _
      %p110 = scmp.lt.s32.totalorder %s17, 2
      // Predicated region
      $region13: #{tpu_custom_call.1} parent=5 // pred_check
        %p111 = pneg %p110
      $region14: #{tpu_custom_call.1} parent=5 // pred_check_branch
        %113 = sbr.rel (%p111) target = $region16
      $region15: #{tpu_custom_call.1} parent=5 // pred_region
        // Predicated region
        $region17: #{tpu_custom_call.1} parent=15 // pred_check
          %p114 = pneg %p37
        $region18: #{tpu_custom_call.1} parent=15 // pred_check_branch
          %116 = sbr.rel (%p114) target = $region20
        $region19: #{tpu_custom_call.1} parent=15 // pred_region
          %s117 = sand.u32 %s27, 1
          %s118 = scalar_lea.sflag [#allocation3], %s117
          %s119 = sand.u32 %s27, 1
          %s120 = smul.addr %s119, 8
          %s121 = scalar_lea.vmem [#allocation2], %s120
          %s123 = ssub.s32 128, 128
          %124 = vsyncadd %s118, %s123
          %s125 = smul.addr %s17, 128
          %s126 = scalar_lea.hbm %s0, %s125
          %s128 = sshll.u32 %s121, 4
          %s129 = int_to_ptr.vmem [resolvable:$true] %s128
          %131 = dma.hbm_to_vmem [thread:$0]  %s126, 128, %s129, %s118
        $region20: #{tpu_custom_call.1} parent=15 // pred_fallthru
          _
        // Predicated region
        $region21: #{tpu_custom_call.1} parent=15 // pred_check
          %p132 = pneg %p63
        $region22: #{tpu_custom_call.1} parent=15 // pred_check_branch
          %134 = sbr.rel (%p132) target = $region24
        $region23: #{tpu_custom_call.1} parent=15 // pred_region
          %s135 = sand.u32 %s53, 1
          %s136 = scalar_lea.sflag [#allocation6], %s135
          %s137 = sand.u32 %s53, 1
          %s138 = smul.addr %s137, 8
          %s139 = scalar_lea.vmem [#allocation5], %s138
          %s141 = ssub.s32 128, 128
          %142 = vsyncadd %s136, %s141
          %s143 = smul.addr %s17, 128
          %s144 = scalar_lea.hbm %s1, %s143
          %s146 = sshll.u32 %s139, 4
          %s147 = int_to_ptr.vmem [resolvable:$true] %s146
          %149 = dma.hbm_to_vmem [thread:$0]  %s144, 128, %s147, %s136
        $region24: #{tpu_custom_call.1} parent=15 // pred_fallthru
          _
      $region16: #{tpu_custom_call.1} parent=5 // pred_fallthru
        _
      %p150 = scmp.le.s32.totalorder 1, %s17
      %p151 = scmp.lt.s32.totalorder %s17, 3
      %p152 = pnand %p150, %p151
      %p153 = pneg %p152
      // Predicated region
      $region25: #{tpu_custom_call.1} parent=5 // pred_check
        _
      $region26: #{tpu_custom_call.1} parent=5 // pred_check_branch
        %155 = sbr.rel (%p152) target = $region28
      $region27: #{tpu_custom_call.1} parent=5 // pred_region
        %s156 = ssub.s32 %s17, 1
        %s157 = sand.u32 %s30, 1
        %s158 = scalar_lea.sflag [#allocation3], %s157
        %s159 = sand.u32 %s30, 1
        %s160 = smul.addr %s159, 8
        %s161 = scalar_lea.vmem [#allocation2], %s160
        // Predicated region
        $region29: #{tpu_custom_call.1} parent=27 // pred_check
          %p162 = pneg %p43
        $region30: #{tpu_custom_call.1} parent=27 // pred_check_branch
          %164 = sbr.rel (%p162) target = $region32
        $region31: #{tpu_custom_call.1} parent=27 // pred_region
          %165 = dma.done %s158, 128
        $region32: #{tpu_custom_call.1} parent=27 // pred_fallthru
          _
        %s166 = sand.u32 %s56, 1
        %s167 = scalar_lea.sflag [#allocation6], %s166
        %s168 = sand.u32 %s56, 1
        %s169 = smul.addr %s168, 8
        %s170 = scalar_lea.vmem [#allocation5], %s169
        // Predicated region
        $region33: #{tpu_custom_call.1} parent=27 // pred_check
          %p171 = pneg %p69
        $region34: #{tpu_custom_call.1} parent=27 // pred_check_branch
          %173 = sbr.rel (%p171) target = $region36
        $region35: #{tpu_custom_call.1} parent=27 // pred_region
          %174 = dma.done %s167, 128
        $region36: #{tpu_custom_call.1} parent=27 // pred_fallthru
          _
        %s175 = sand.u32 %s30, 1
        %s176 = scalar_lea.sflag [#allocation3], %s175
        %s177 = sand.u32 %s30, 1
        %s178 = smul.addr %s177, 8
        %s179 = scalar_lea.vmem [#allocation2], %s178
        %p180 = pneg %p43
        %p181 = pneg %p40
        %s182 = sand.u32 %s56, 1
        %s183 = scalar_lea.sflag [#allocation6], %s182
        %s184 = sand.u32 %s56, 1
        %s185 = smul.addr %s184, 8
        %s186 = scalar_lea.vmem [#allocation5], %s185
        %p187 = pneg %p69
        %p188 = pneg %p66
        %p189 = pneg %p95
        %p190 = pneg %p92
        %s191 = sand.u32 %s82, 1
        %s192 = scalar_lea.sflag [#allocation4], %s191
        %s193 = sand.u32 %s82, 1
        %s194 = smul.addr %s193, 8
        %s195 = scalar_lea.vmem [#allocation7], %s194
        %v196 = vld [vmem:[%s161] sm:$0xff]
        %v197 = vld [vmem:[%s170] sm:$0xff]
        %v198 = vmul.f32 %v196, %v197
        %199 = vst [vmem:[%s195] sm:$0xff] %v198
        %s200 = sand.u32 %s82, 1
        %s201 = scalar_lea.sflag [#allocation4], %s200
        %s202 = sand.u32 %s82, 1
        %s203 = smul.addr %s202, 8
        %s204 = scalar_lea.vmem [#allocation7], %s203
        // Predicated region
        $region37: #{tpu_custom_call.1} parent=27 // pred_check
          %p205 = pneg %p92
        $region38: #{tpu_custom_call.1} parent=27 // pred_check_branch
          %207 = sbr.rel (%p205) target = $region40
        $region39: #{tpu_custom_call.1} parent=27 // pred_region
          %s209 = ssub.s32 128, 128
          %210 = vsyncadd %s201, %s209
          %s211 = smul.addr %s22, 128
          %s212 = scalar_lea.hbm %s2, %s211
          %s214 = sshll.u32 %s204, 4
          %s215 = int_to_ptr.vmem [resolvable:$true] %s214
          %217 = dma.vmem_to_hbm [thread:$0]  %s215, 128, %s212, %s201
        $region40: #{tpu_custom_call.1} parent=27 // pred_fallthru
          _
      $region28: #{tpu_custom_call.1} parent=5 // pred_fallthru
        _
      %p218 = scmp.le.s32.totalorder 2, %s17
      // Predicated region
      $region41: #{tpu_custom_call.1} parent=5 // pred_check
        %p219 = pneg %p218
      $region42: #{tpu_custom_call.1} parent=5 // pred_check_branch
        %221 = sbr.rel (%p219) target = $region44
      $region43: #{tpu_custom_call.1} parent=5 // pred_region
        %s222 = ssub.s32 %s17, 2
        // Predicated region
        $region45: #{tpu_custom_call.1} parent=43 // pred_check
          %p223 = pneg %p98
        $region46: #{tpu_custom_call.1} parent=43 // pred_check_branch
          %225 = sbr.rel (%p223) target = $region48
        $region47: #{tpu_custom_call.1} parent=43 // pred_region
          %s226 = sand.u32 %s83, 1
          %s227 = scalar_lea.sflag [#allocation4], %s226
          %s228 = sand.u32 %s83, 1
          %s229 = smul.addr %s228, 8
          %s230 = scalar_lea.vmem [#allocation7], %s229
          %231 = dma.done %s227, 128
        $region48: #{tpu_custom_call.1} parent=43 // pred_fallthru
          _
      $region44: #{tpu_custom_call.1} parent=5 // pred_fallthru
        _
    $region6: #{tpu_custom_call.1} parent=1 // loop_footer
      %s21 = sadd.s32 1, %s17
    $region7: #{tpu_custom_call.1} parent=1 // loop_footer_branch
      %16 = sbr.rel target = $region3
    $region8: #{tpu_custom_call.1} parent=1 // loop_exit
      _
    %232 = vsyncpa [#allocation3], 1
    %s233 = scalar_lea.sflag [#allocation3], 1
    %234 = vsyncpa %s233, 1
    %235 = vsyncpa [#allocation6], 1
    %s236 = scalar_lea.sflag [#allocation6], 1
    %237 = vsyncpa %s236, 1
    %238 = vsyncpa [#allocation4], 1
    %s239 = scalar_lea.sflag [#allocation4], 1
    %240 = vsyncpa %s239, 1

</llo_original>
